<compile_context>
chip_gen: v7x
topology: tpu7x:2x2x1
jax: 0.10.0
libtpu: 0.0.40
codegen_flags: <defaults>
</compile_context>

<pallas_src>
import math

import numpy as np

import jax
import jax.numpy as jnp
from jax.experimental import pallas as pl
from jax.experimental.pallas import tpu as pltpu


# ----------------------------------------------------------------------------
# Pallas kernel
# ----------------------------------------------------------------------------
def _token_embedding_kernel(x_ref, w_ref, b_ref, o_ref):
    # x_ref: (Bt, L, C)   w_ref: (3*C, d_model)   b_ref: (1, d_model)
    # o_ref: (Bt, L, d_model)
    Bt, L, C = x_ref.shape
    d_model = o_ref.shape[-1]

    # Build the fused tap matrix [x_prev | x | x_next] per batch row.  Rolls
    # run on the XLU and must happen per (L, C) row slab BEFORE flattening so
    # taps never wrap across batch boundaries.
    rows = []
    for b in range(Bt):                              # Bt is small & static
        xb = x_ref[b]                                # (L, C) f32
        x_prev = pltpu.roll(xb, shift=1, axis=0)     # x[(l - 1) % L]
        x_next = pltpu.roll(xb, shift=L - 1, axis=0) # x[(l + 1) % L]
        rows.append(jnp.concatenate([x_prev, xb, x_next], axis=-1))  # (L, 3C)
    x_ext = jnp.concatenate(rows, axis=0) if Bt > 1 else rows[0]     # (Bt*L, 3C)

    # One MXU matmul for all three taps and all Bt rows.
    acc = jnp.dot(x_ext, w_ref[...], preferred_element_type=jnp.float32)
    acc = acc + b_ref[...]                           # (Bt*L, d_model)

    o_ref[...] = acc.reshape(Bt, L, d_model).astype(o_ref.dtype)


def _pick_bt(B, L, d_model):
    """Largest divisor of B giving a ~<=1 MiB output tile and >=2 grid steps."""
    row_bytes = L * d_model * 4
    cap = max(1, (1 << 20) // max(row_bytes, 1))
    if B >= 2:
        cap = min(cap, B // 2)       # keep >= 2 parallel steps (v7x dual TC)
    bt = 1
    for d in range(1, B + 1):
        if B % d == 0 and d <= cap:
            bt = d
    return bt


@jax.jit
def _token_embedding_pallas(x, w_flat, bias):
    """x: (B, L, C) f32, w_flat: (3*C, d_model) f32, bias: (1, d_model) f32."""
    B, L, C = x.shape
    d_model = w_flat.shape[-1]
    bt = _pick_bt(B, L, d_model)     # static at trace time

    cost = pl.CostEstimate(
        flops=2 * B * L * (3 * C) * d_model,
        transcendentals=0,
        bytes_accessed=4 * (B * L * C + B * L * d_model + 3 * C * d_model + d_model),
    )

    return pl.pallas_call(
        _token_embedding_kernel,
        out_shape=jax.ShapeDtypeStruct((B, L, d_model), jnp.float32),
        grid=(B // bt,),
        in_specs=[
            pl.BlockSpec((bt, L, C), lambda i: (i, 0, 0)),        # per-step batch tile
            pl.BlockSpec((3 * C, d_model), lambda i: (0, 0)),     # resident weights
            pl.BlockSpec((1, d_model), lambda i: (0, 0)),         # resident bias
        ],
        out_specs=pl.BlockSpec((bt, L, d_model), lambda i: (i, 0, 0)),
        compiler_params=pltpu.CompilerParams(
            dimension_semantics=("parallel",),
        ),
        cost_estimate=cost,
    )(x, w_flat, bias)


# ----------------------------------------------------------------------------
# Module wrapper (parameters + one-time layout plumbing in plain JAX)
# ----------------------------------------------------------------------------
class TokenEmbeddingPallas:
    def __init__(self, c_in, d_model, param_key=None):
        self.c_in = c_in
        self.d_model = d_model
        if param_key is None:
            param_key = jax.random.PRNGKey(1)
        kw, kb = jax.random.split(param_key)

        # Conv1d(c_in, d_model, k=3): weight (d_model, c_in, 3), bias (d_model,)
        # kaiming_normal_(mode='fan_in', nonlinearity='leaky_relu', a=0):
        #   std = sqrt(2) / sqrt(fan_in), fan_in = c_in * kernel_size
        fan_in = c_in * 3
        std = math.sqrt(2.0) / math.sqrt(fan_in)
        self.weight = std * jax.random.normal(kw, (d_model, c_in, 3), jnp.float32)
        bound = 1.0 / math.sqrt(fan_in)
        self.bias = jax.random.uniform(kb, (d_model,), jnp.float32, -bound, bound)

        # Pre-lay-out parameters ONCE (no per-forward transpose / HBM trip):
        #   w_flat row block k holds tap k, i.e. rows [k*C : (k+1)*C] = W[:, :, k].T
        w_k = jnp.transpose(self.weight, (2, 1, 0))          # (3, c_in, d_model)
        w_flat = w_k.reshape(3 * c_in, d_model)
        b2d = self.bias.reshape(1, d_model)

        # Pad d_model to a multiple of 128 -> lane-dense (unmasked) output stores.
        d_pad = (-d_model) % 128
        self.d_model_padded = d_model + d_pad
        if d_pad:
            w_flat = jnp.pad(w_flat, ((0, 0), (0, d_pad)))
            b2d = jnp.pad(b2d, ((0, 0), (0, d_pad)))
        self.w_flat = jax.device_put(w_flat)
        self.b2d = jax.device_put(b2d)

    def __call__(self, x):
        # x: (B, L, c_in)  (the torch forward permutes to (B, c_in, L) internally)
        x = x.astype(jnp.float32)
        out = _token_embedding_pallas(x, self.w_flat, self.b2d)  # (B, L, d_model_padded)
        if self.d_model_padded != self.d_model:
            out = out[..., : self.d_model]
        return out


# ----------------------------------------------------------------------------
# Pure-JAX reference (mirrors the torch circular conv) for self-check
# ----------------------------------------------------------------------------
def _reference_forward(x, weight, bias):
    x = x.astype(jnp.float32)
    out = jnp.zeros(x.shape[:2] + (weight.shape[0],), jnp.float32) + bias[None, None, :]
    for k in range(3):
        xs = jnp.roll(x, shift=1 - k, axis=1)            # x[(l + k - 1) % L]
        out = out + jnp.einsum("blc,oc->blo", xs, weight[:, :, k])
    return out


if __name__ == "__main__":
    B, L, c_in, d_model = 4, 32, 7, 128

    key = jax.random.PRNGKey(0)
    x = jax.random.normal(key, (B, L, c_in), jnp.float32)

    layer = TokenEmbeddingPallas(c_in=c_in, d_model=d_model)

    out = jax.block_until_ready(layer(x))
    assert out.shape == (B, L, d_model), out.shape

    ref = jax.block_until_ready(_reference_forward(x, layer.weight, layer.bias))
    np.testing.assert_allclose(np.asarray(out), np.asarray(ref), rtol=1e-4, atol=1e-4)

    print("KERNEL_OK")
</pallas_src>

<mosaic_0001>
module attributes {stable_mosaic.version = 11 : i64} {
  func.func @_token_embedding_kernel(%arg0: i32, %arg1: memref<2x32x7xf32, #tpu.memory_space<vmem>>, %arg2: memref<21x128xf32, #tpu.memory_space<vmem>>, %arg3: memref<1x128xf32, #tpu.memory_space<vmem>>, %arg4: memref<2x32x128xf32, #tpu.memory_space<vmem>>) attributes {dimension_semantics = [#tpu.dimension_semantics<parallel>], iteration_bounds = array<i64: 2>, scalar_prefetch = 0 : i64, scratch_operands = 0 : i64, tpu.core_type = #tpu.core_type<tc>, window_params = [{transform_indices = @transform_0, window_bounds = array<i64: 2, 32, 7>}, {pipeline_mode = #tpu.pipeline_mode<synchronous>, transform_indices = @transform_1, window_bounds = array<i64: 21, 128>}, {pipeline_mode = #tpu.pipeline_mode<synchronous>, transform_indices = @transform_2, window_bounds = array<i64: 1, 128>}, {transform_indices = @transform_3, window_bounds = array<i64: 2, 32, 128>}]} {
    %c0 = arith.constant 0 : index
    %c0_0 = arith.constant 0 : index
    %c0_1 = arith.constant 0 : index
    %0 = vector.load %arg1[%c0, %c0_0, %c0_1] : memref<2x32x7xf32, #tpu.memory_space<vmem>>, vector<1x32x7xf32>
    %1 = vector.shape_cast %0 : vector<1x32x7xf32> to vector<32x7xf32>
    %c1_i32 = arith.constant 1 : i32
    %2 = tpu.dynamic_rotate %1 by %c1_i32 dim 0 : vector<32x7xf32>, i32 -> vector<32x7xf32>
    %c31_i32 = arith.constant 31 : i32
    %3 = tpu.dynamic_rotate %1 by %c31_i32 dim 0 : vector<32x7xf32>, i32 -> vector<32x7xf32>
    %4 = tpu.concatenate %2, %1, %3 in 1 : vector<32x7xf32>, vector<32x7xf32>, vector<32x7xf32> -> vector<32x21xf32>
    %c1 = arith.constant 1 : index
    %c0_2 = arith.constant 0 : index
    %c0_3 = arith.constant 0 : index
    %5 = vector.load %arg1[%c1, %c0_2, %c0_3] : memref<2x32x7xf32, #tpu.memory_space<vmem>>, vector<1x32x7xf32>
    %6 = vector.shape_cast %5 : vector<1x32x7xf32> to vector<32x7xf32>
    %c1_i32_4 = arith.constant 1 : i32
    %7 = tpu.dynamic_rotate %6 by %c1_i32_4 dim 0 : vector<32x7xf32>, i32 -> vector<32x7xf32>
    %c31_i32_5 = arith.constant 31 : i32
    %8 = tpu.dynamic_rotate %6 by %c31_i32_5 dim 0 : vector<32x7xf32>, i32 -> vector<32x7xf32>
    %9 = tpu.concatenate %7, %6, %8 in 1 : vector<32x7xf32>, vector<32x7xf32>, vector<32x7xf32> -> vector<32x21xf32>
    %10 = tpu.concatenate %4, %9 in 0 : vector<32x21xf32>, vector<32x21xf32> -> vector<64x21xf32>
    %c0_6 = arith.constant 0 : index
    %c0_7 = arith.constant 0 : index
    %11 = vector.load %arg2[%c0_6, %c0_7] : memref<21x128xf32, #tpu.memory_space<vmem>>, vector<21x128xf32>
    %cst = arith.constant dense<0.000000e+00> : vector<64x128xf32>
    %12 = tpu.matmul %10, %11, %cst {dimension_numbers = #tpu.dot_dimension_numbers<[1], [0], [0], [1], [0, 0, 1, 1], [], []>} : vector<64x21xf32>, vector<21x128xf32>, vector<64x128xf32> -> vector<64x128xf32>
    %c0_8 = arith.constant 0 : index
    %c0_9 = arith.constant 0 : index
    %13 = vector.load %arg3[%c0_8, %c0_9] : memref<1x128xf32, #tpu.memory_space<vmem>>, vector<1x128xf32>
    %14 = vector.broadcast %13 : vector<1x128xf32> to vector<64x128xf32>
    %15 = arith.addf %12, %14 : vector<64x128xf32>
    %16 = vector.shape_cast %15 : vector<64x128xf32> to vector<2x32x128xf32>
    %c0_10 = arith.constant 0 : index
    %c0_11 = arith.constant 0 : index
    %c0_12 = arith.constant 0 : index
    %17 = vector.load %arg4[%c0_10, %c0_11, %c0_12] : memref<2x32x128xf32, #tpu.memory_space<vmem>>, vector<2x32x128xf32>
    tpu.vector_store %arg4[%c0_10, %c0_11, %c0_12], %16 {strides = array<i32>} : memref<2x32x128xf32, #tpu.memory_space<vmem>>, vector<2x32x128xf32>,
    return
  }
  func.func @transform_0(%arg0: i32) -> (i32, i32, i32) {
    %c0_i32 = arith.constant 0 : i32
    %c0_i32_0 = arith.constant 0 : i32
    %c0_i32_1 = arith.constant 0 : i32
    return %arg0, %c0_i32, %c0_i32_0 : i32, i32, i32
  }
  func.func @transform_1(%arg0: i32) -> (i32, i32) {
    %c0_i32 = arith.constant 0 : i32
    %c0_i32_0 = arith.constant 0 : i32
    %c0_i32_1 = arith.constant 0 : i32
    return %c0_i32, %c0_i32_0 : i32, i32
  }
  func.func @transform_2(%arg0: i32) -> (i32, i32) {
    %c0_i32 = arith.constant 0 : i32
    %c0_i32_0 = arith.constant 0 : i32
    %c0_i32_1 = arith.constant 0 : i32
    return %c0_i32, %c0_i32_0 : i32, i32
  }
  func.func @transform_3(%arg0: i32) -> (i32, i32, i32) {
    %c0_i32 = arith.constant 0 : i32
    %c0_i32_0 = arith.constant 0 : i32
    %c0_i32_1 = arith.constant 0 : i32
    return %arg0, %c0_i32, %c0_i32_0 : i32, i32, i32
  }
}

</mosaic_0001>

<llo_original>
// kernel: _token_embedding_pallas.1
$region0: #{_token_embedding_pallas.1}
  #allocation0 [shape = 'u32[]', space=smem, size = 0x4, offset = 0x4, fixed_abs, tag = 'smem constant byte address 0x4 - core index']
  #allocation1 [shape = 'u32[144,128]{1,0:T(1,128)}', space=vmem, size = 0x12000, scoped, tag = 'internal scratch']
  %s0 = inlined_call_operand.vmem [shape: f32[4,32,7], index: 0, kind: input, shape index: {}]
  %s1 = inlined_call_operand.vmem [shape: f32[21,128], index: 1, kind: input, shape index: {}]
  %s2 = inlined_call_operand.vmem [shape: f32[1,128], index: 2, kind: input, shape index: {}]
  %s3 = inlined_call_operand.hbm [shape: f32[4,32,128], index: 3, kind: output, shape index: {}]
  %s4 = sld [smem:[#allocation0]]
  $region45: #{_token_embedding_pallas.1} parent=0
    _
  %s6 = ssub.s32 1, %s4
  %s7 = scalar_select 0, %s6, %s4
  $region1: #{_token_embedding_pallas.1} parent=0
    #allocation2 [shape = 'u8[65536]{0}', space=vmem, size = 0x10000, scoped, tag = 'output window, operand 0']
    #allocation3 [shape = 's32[2]{0}', space=sflag, size = 0x8, scoped, tag = 'scoped memory for _token_embedding_pallas.1']
    %8 = vsyncpa [#allocation3], 0
    %s9 = scalar_lea.sflag [#allocation3], 1
    %10 = vsyncpa %s9, 0
    loop: start=0, step=1, limit=4
    $region2: #{_token_embedding_pallas.1} parent=1 // loop_pre_header
      _
    $region3: #{_token_embedding_pallas.1} parent=1 // loop_header
      %s12 = sphi 0, %s16
      %p13 = scmp.ge.s32.totalorder %s12, 4
      %s22 = sphi 0, %s24
      %s25 = sphi 0, %s22
      %s26 = sphi 0, %s25
      %s42 = sphi 0, %s26
      %s46 = sphi 0, %s46
      %s48 = sphi 0, %s46
      %s49 = sphi 0, %s48
      %s63 = sphi 0, %s49
      %s67 = sphi 0, %s67
      %s69 = sphi 0, %s67
      %s70 = sphi 0, %s69
      %s84 = sphi 0, %s70
      %s90 = sphi 0, %s92
      %s93 = sphi 0, %s90
      %s94 = sphi 0, %s93
      %s110 = sphi 0, %s94
    $region4: #{_token_embedding_pallas.1} parent=1 // loop_header_branch
      %15 = sbr.rel (%p13) target = $region8
    $region5: #{_token_embedding_pallas.1} parent=1 // loop_body
      %s17 = ssub.s32 %s12, 1
      %s18 = ssub.s32 %s12, 2
      %s19 = sadd.s32 %s12, 1
      %s20 = ssub.s32 %s12, %s19
      %p21 = scmp.eq.s32.totalorder %s20, 0
      %s23 = sadd.s32 %s22, 1
      %s24 = scalar_select %p21, %s22, %s23
      %p27 = pneg %p21
      %p28 = scmp.eq.s32.totalorder %s12, 1
      %p29 = por %p27, %p28
      %p30 = scmp.ne.s32.totalorder %s22, %s25
      %p31 = scmp.eq.s32.totalorder %s12, 0
      %p32 = por %p30, %p31
      %p33 = scmp.ne.s32.totalorder %s22, %s25
      %p34 = scmp.eq.s32.totalorder %s17, 1
      %p35 = por %p33, %p34
      %p36 = scmp.ne.s32.totalorder %s25, %s26
      %p37 = scmp.eq.s32.totalorder %s17, 0
      %p38 = por %p36, %p37
      %p39 = scmp.ne.s32.totalorder %s25, %s26
      %p40 = scmp.eq.s32.totalorder %s18, 1
      %p41 = por %p39, %p40
      %p43 = scmp.ne.s32.totalorder %s26, %s42
      %p44 = scmp.eq.s32.totalorder %s18, 0
      %p45 = por %p43, %p44
      %s47 = sadd.s32 %s46, 1
      %p50 = scmp.eq.s32.totalorder %s12, 1
      %p51 = scmp.ne.s32.totalorder %s46, %s48
      %p52 = scmp.eq.s32.totalorder %s12, 0
      %p53 = por %p51, %p52
      %p54 = scmp.ne.s32.totalorder %s46, %s48
      %p55 = scmp.eq.s32.totalorder %s17, 1
      %p56 = por %p54, %p55
      %p57 = scmp.ne.s32.totalorder %s48, %s49
      %p58 = scmp.eq.s32.totalorder %s17, 0
      %p59 = por %p57, %p58
      %p60 = scmp.ne.s32.totalorder %s48, %s49
      %p61 = scmp.eq.s32.totalorder %s18, 1
      %p62 = por %p60, %p61
      %p64 = scmp.ne.s32.totalorder %s49, %s63
      %p65 = scmp.eq.s32.totalorder %s18, 0
      %p66 = por %p64, %p65
      %s68 = sadd.s32 %s67, 1
      %p71 = scmp.eq.s32.totalorder %s12, 1
      %p72 = scmp.ne.s32.totalorder %s67, %s69
      %p73 = scmp.eq.s32.totalorder %s12, 0
      %p74 = por %p72, %p73
      %p75 = scmp.ne.s32.totalorder %s67, %s69
      %p76 = scmp.eq.s32.totalorder %s17, 1
      %p77 = por %p75, %p76
      %p78 = scmp.ne.s32.totalorder %s69, %s70
      %p79 = scmp.eq.s32.totalorder %s17, 0
      %p80 = por %p78, %p79
      %p81 = scmp.ne.s32.totalorder %s69, %s70
      %p82 = scmp.eq.s32.totalorder %s18, 1
      %p83 = por %p81, %p82
      %p85 = scmp.ne.s32.totalorder %s70, %s84
      %p86 = scmp.eq.s32.totalorder %s18, 0
      %p87 = por %p85, %p86
      %s88 = ssub.s32 %s12, %s19
      %p89 = scmp.eq.s32.totalorder %s88, 0
      %s91 = sadd.s32 %s90, 1
      %s92 = scalar_select %p89, %s90, %s91
      %p95 = pneg %p89
      %p96 = scmp.eq.s32.totalorder %s12, 1
      %p97 = por %p95, %p96
      %p98 = scmp.ne.s32.totalorder %s90, %s93
      %p99 = scmp.eq.s32.totalorder %s12, 0
      %p100 = por %p98, %p99
      %p101 = scmp.ne.s32.totalorder %s90, %s93
      %p102 = scmp.eq.s32.totalorder %s17, 1
      %p103 = por %p101, %p102
      %p104 = scmp.ne.s32.totalorder %s93, %s94
      %p105 = scmp.eq.s32.totalorder %s17, 0
      %p106 = por %p104, %p105
      %p107 = scmp.ne.s32.totalorder %s93, %s94
      %p108 = scmp.eq.s32.totalorder %s18, 1
      %p109 = por %p107, %p108
      %p111 = scmp.ne.s32.totalorder %s94, %s110
      %p112 = scmp.eq.s32.totalorder %s18, 0
      %p113 = por %p111, %p112
      %p114 = scmp.le.s32.totalorder 1, %s12
      %p115 = scmp.lt.s32.totalorder %s12, 3
      %p116 = pnand %p114, %p115
      %p117 = pneg %p116
      // Predicated region
      $region9: #{_token_embedding_pallas.1} parent=5 // pred_check
        _
      $region10: #{_token_embedding_pallas.1} parent=5 // pred_check_branch
        %119 = sbr.rel (%p116) target = $region12
      $region11: #{_token_embedding_pallas.1} parent=5 // pred_region
        %s120 = ssub.s32 %s12, 1
        // Predicated region
        $region13: #{_token_embedding_pallas.1} parent=11 // pred_check
          %p121 = pneg %p59
        $region14: #{_token_embedding_pallas.1} parent=11 // pred_check_branch
          %123 = sbr.rel (%p121) target = $region16
        $region15: #{_token_embedding_pallas.1} parent=11 // pred_region
          _
        $region16: #{_token_embedding_pallas.1} parent=11 // pred_fallthru
          _
        // Predicated region
        $region17: #{_token_embedding_pallas.1} parent=11 // pred_check
          %p124 = pneg %p80
        $region18: #{_token_embedding_pallas.1} parent=11 // pred_check_branch
          %126 = sbr.rel (%p124) target = $region20
        $region19: #{_token_embedding_pallas.1} parent=11 // pred_region
          _
        $region20: #{_token_embedding_pallas.1} parent=11 // pred_fallthru
          _
      $region12: #{_token_embedding_pallas.1} parent=5 // pred_fallthru
        _
      %p127 = scmp.lt.s32.totalorder %s12, 2
      // Predicated region
      $region21: #{_token_embedding_pallas.1} parent=5 // pred_check
        %p128 = pneg %p127
      $region22: #{_token_embedding_pallas.1} parent=5 // pred_check_branch
        %130 = sbr.rel (%p128) target = $region24
      $region23: #{_token_embedding_pallas.1} parent=5 // pred_region
        // Predicated region
        $region25: #{_token_embedding_pallas.1} parent=23 // pred_check
          %p131 = pneg %p32
        $region26: #{_token_embedding_pallas.1} parent=23 // pred_check_branch
          %133 = sbr.rel (%p131) target = $region28
        $region27: #{_token_embedding_pallas.1} parent=23 // pred_region
          %s134 = smul.u32 2, %s12
          %p135 = scmp.lt.s32.totalorder %s134, 3
          %s136 = scalar_select %p135, %s134, 3
          %s137 = smul.addr %s136, 4
          %s138 = smul.addr %s137, 8
          %s139 = scalar_lea.vmem %s0, %s138
          %s140 = smul.u32 2, %s12
        $region28: #{_token_embedding_pallas.1} parent=23 // pred_fallthru
          _
      $region24: #{_token_embedding_pallas.1} parent=5 // pred_fallthru
        _
      %p141 = scmp.le.s32.totalorder 1, %s12
      %p142 = scmp.lt.s32.totalorder %s12, 3
      %p143 = pnand %p141, %p142
      %p144 = pneg %p143
      // Predicated region
      $region29: #{_token_embedding_pallas.1} parent=5 // pred_check
        _
      $region30: #{_token_embedding_pallas.1} parent=5 // pred_check_branch
        %146 = sbr.rel (%p143) target = $region32
      $region31: #{_token_embedding_pallas.1} parent=5 // pred_region
        %s147 = ssub.s32 %s12, 1
        %s148 = smul.u32 2, %s17
        %p149 = scmp.lt.s32.totalorder %s148, 3
        %s150 = scalar_select %p149, %s148, 3
        %s151 = smul.addr %s150, 4
        %s152 = smul.addr %s151, 8
        %s153 = scalar_lea.vmem %s0, %s152
        %p154 = pneg %p38
        %p155 = pneg %p35
        %p156 = pneg %p59
        %p157 = pneg %p56
        %p158 = pneg %p80
        %p159 = pneg %p77
        %p160 = pneg %p106
        %p161 = pneg %p103
        %s162 = sand.u32 %s93, 1
        %s163 = scalar_lea.sflag [#allocation3], %s162
        %s164 = sand.u32 %s93, 1
        %s165 = smul.addr %s164, 64
        %s166 = scalar_lea.vmem [#allocation2], %s165
        %s167 = smul.u32 2, %s17
        %p168 = scmp.lt.s32.totalorder %s167, 3
        %s169 = scalar_select %p168, %s167, 3
        %s170 = smul.addr %s169, 4
        %s171 = smul.addr %s170, 8
        %s172 = scalar_lea.vmem %s0, %s171
        %s173 = smul.u32 2, %s17
        %s174 = smul.u32 2, %s17
        %v175 = vld [vmem:[%s172] sm:$0xff]
        %v176 = vld [vmem:[%s172 + $0x8] sm:$0xff]
        %v177 = vld [vmem:[%s172 + $0x10] sm:$0xff]
        %v178 = vld [vmem:[%s172 + $0x18] sm:$0xff]
        %v179 = vrot.slane %v175, 7
        %v180 = vrot.slane %v176, 7
        %v181 = vrot.slane %v177, 7
        %v182 = vrot.slane %v178, 7
        %v183 = vlaneseq
        %v184 = vshrl.u32 %v183, 7
        %vm185 = vcmp.lt.s32.totalorder %v184, 1
        %v186 = vsel %vm185, %v181, %v182
        %v187 = vsel %vm185, %v180, %v181
        %v188 = vsel %vm185, %v179, %v180
        %v189 = vsel %vm185, %v182, %v179
        %v190 = vrot.slane %v175, 1
        %v191 = vrot.slane %v176, 1
        %v192 = vrot.slane %v177, 1
        %v193 = vrot.slane %v178, 1
        %vm194 = vcmp.lt.s32.totalorder %v184, 7
        %v195 = vsel %vm194, %v192, %v193
        %v196 = vsel %vm194, %v191, %v192
        %v197 = vsel %vm194, %v190, %v191
        %v198 = vsel %vm194, %v193, %v190
        %203 = vrot.lane.b32.xlu0 %v175, 7
        %v204 = vpop.permute.xlu0 %203
        %205 = vrot.lane.b32.xlu0 %v176, 7
        %v206 = vpop.permute.xlu0 %205
        %207 = vrot.lane.b32.xlu0 %v177, 7
        %v208 = vpop.permute.xlu0 %207
        %209 = vrot.lane.b32.xlu0 %v178, 7
        %v210 = vpop.permute.xlu0 %209
        %219 = vrot.lane.b32.xlu0 %v197, 14
        %v220 = vpop.permute.xlu0 %219
        %221 = vrot.lane.b32.xlu0 %v196, 14
        %v222 = vpop.permute.xlu0 %221
        %223 = vrot.lane.b32.xlu0 %v195, 14
        %v224 = vpop.permute.xlu0 %223
        %225 = vrot.lane.b32.xlu0 %v198, 14
        %v226 = vpop.permute.xlu0 %225
        %vm231 = vcmask 56320
        %v232 = vsel %vm231, %v189, %v204
        %v233 = vsel %vm231, %v188, %v206
        %v234 = vsel %vm231, %v187, %v208
        %v235 = vsel %vm231, %v186, %v210
        %vm236 = vcmask 113664
        %v237 = vsel %vm236, %v232, %v220
        %v238 = vsel %vm236, %v233, %v222
        %v239 = vsel %vm236, %v234, %v224
        %v240 = vsel %vm236, %v235, %v226
        %s241 = scalar_lea.vmem %s172, 32
        %v242 = vld [vmem:[%s241] sm:$0xff]
        %v243 = vld [vmem:[%s241 + $0x8] sm:$0xff]
        %v244 = vld [vmem:[%s241 + $0x10] sm:$0xff]
        %v245 = vld [vmem:[%s241 + $0x18] sm:$0xff]
        %v246 = vrot.slane %v242, 7
        %v247 = vrot.slane %v243, 7
        %v248 = vrot.slane %v244, 7
        %v249 = vrot.slane %v245, 7
        %v250 = vsel %vm185, %v248, %v249
        %v251 = vsel %vm185, %v247, %v248
        %v252 = vsel %vm185, %v246, %v247
        %v253 = vsel %vm185, %v249, %v246
        %v254 = vrot.slane %v242, 1
        %v255 = vrot.slane %v243, 1
        %v256 = vrot.slane %v244, 1
        %v257 = vrot.slane %v245, 1
        %v258 = vsel %vm194, %v256, %v257
        %v259 = vsel %vm194, %v255, %v256
        %v260 = vsel %vm194, %v254, %v255
        %v261 = vsel %vm194, %v257, %v254
        %266 = vrot.lane.b32.xlu0 %v242, 7
        %v267 = vpop.permute.xlu0 %266
        %268 = vrot.lane.b32.xlu0 %v243, 7
        %v269 = vpop.permute.xlu0 %268
        %270 = vrot.lane.b32.xlu0 %v244, 7
        %v271 = vpop.permute.xlu0 %270
        %272 = vrot.lane.b32.xlu0 %v245, 7
        %v273 = vpop.permute.xlu0 %272
        %282 = vrot.lane.b32.xlu0 %v260, 14
        %v283 = vpop.permute.xlu0 %282
        %284 = vrot.lane.b32.xlu0 %v259, 14
        %v285 = vpop.permute.xlu0 %284
        %286 = vrot.lane.b32.xlu0 %v258, 14
        %v287 = vpop.permute.xlu0 %286
        %288 = vrot.lane.b32.xlu0 %v261, 14
        %v289 = vpop.permute.xlu0 %288
        %v294 = vsel %vm231, %v253, %v267
        %v295 = vsel %vm231, %v252, %v269
        %v296 = vsel %vm231, %v251, %v271
        %v297 = vsel %vm231, %v250, %v273
        %v298 = vsel %vm236, %v294, %v283
        %v299 = vsel %vm236, %v295, %v285
        %v300 = vsel %vm236, %v296, %v287
        %v301 = vsel %vm236, %v297, %v289
        %v302 = vld [vmem:[%s1] sm:$0xff]
        %v303 = vld [vmem:[%s1 + $0x8] sm:$0xff]
        %v304 = vld [vmem:[%s1 + $0x10] sm:$0x1f]
        %v305 = vld [vmem:[%s2] sm:$0x1]
        %v307 = vlaneseq
        %v308 = vshrl.u32 %v307, 7
        %v309 = vsub.s32 0, %v308
        %v310 = vrot.slane %v305, %v309
        %vm312 = vcmask 171008
        %v314 = vsel %vm312, %v237, 0
        %v317 = vsel %vm312, %v238, 0
        %v320 = vsel %vm312, %v239, 0
        %v323 = vsel %vm312, %v240, 0
        %v326 = vsel %vm312, %v298, 0
        %v329 = vsel %vm312, %v299, 0
        %v332 = vsel %vm312, %v300, 0
        %v335 = vsel %vm312, %v301, 0
        %vm337 = vcmask 1044480
        %v339 = vsel %vm337, %v304, 0
        %341 = vmatprep.subr.mxu0 0.0
        %342 = vmatpush1.msra.mxu0 %v302
        %343 = vmatprep.subr.mxu0 0.0
        %344 = vmatpush1.msra.mxu0 %v303
        %345 = vmatprep.subr.mxu0 0.0
        %346 = vmatpush1.msra.mxu0 %v339
        %347 = vmatprep.subr.mxu0 0.0
        %348 = vmatpush1.msra.mxu0 0.0
        %349 = vmatprep.subr.mxu0 0.0
        %350 = vmatpush1.msra.mxu0 0.0
        %351 = vmatprep.subr.mxu0 0.0
        %352 = vmatpush1.msra.mxu0 0.0
        %353 = vmatprep.subr.mxu0 0.0
        %354 = vmatpush1.msra.mxu0 0.0
        %355 = vmatprep.subr.mxu0 0.0
        %356 = vmatpush1.msra.mxu0 0.0
        %357 = vmatprep.subr.mxu0 0.0
        %358 = vmatpush1.msra.mxu0 0.0
        %359 = vmatprep.subr.mxu0 0.0
        %360 = vmatpush1.msra.mxu0 0.0
        %361 = vmatprep.subr.mxu0 0.0
        %362 = vmatpush1.msra.mxu0 0.0
        %363 = vmatprep.subr.mxu0 0.0
        %364 = vmatpush1.msra.mxu0 0.0
        %365 = vmatprep.subr.mxu0 0.0
        %366 = vmatpush1.msra.mxu0 0.0
        %367 = vmatprep.subr.mxu0 0.0
        %368 = vmatpush1.msra.mxu0 0.0
        %369 = vmatprep.subr.mxu0 0.0
        %370 = vmatpush1.msra.mxu0 0.0
        %371 = vmatprep.subr.mxu0 0.0
        %372 = vmatpush1.msra.mxu0 0.0
        %373 = vmatprep.subr.mxu0 0.0
        %374 = vmatpush1.msra.mxu0 0.0
        %375 = vmatprep.subr.mxu0 0.0
        %376 = vmatpush1.msra.mxu0 0.0
        %377 = vmatprep.subr.mxu0 0.0
        %378 = vmatpush1.msra.mxu0 0.0
        %379 = vmatprep.subr.mxu0 0.0
        %380 = vmatpush1.msra.mxu0 0.0
        %381 = vmatprep.subr.mxu0 0.0
        %382 = vmatpush1.msra.mxu0 0.0
        %383 = vmatprep.subr.mxu0 0.0
        %384 = vmatpush1.msra.mxu0 0.0
        %385 = vmatprep.subr.mxu0 0.0
        %386 = vmatpush1.msra.mxu0 0.0
        %387 = vmatprep.subr.mxu0 0.0
        %388 = vmatpush1.msra.mxu0 0.0
        %389 = vmatprep.subr.mxu0 0.0
        %390 = vmatpush1.msra.mxu0 0.0
        %391 = vmatprep.subr.mxu0 0.0
        %392 = vmatpush1.msra.mxu0 0.0
        %393 = vmatprep.subr.mxu0 0.0
        %394 = vmatpush1.msra.mxu0 0.0
        %395 = vmatprep.subr.mxu0 0.0
        %396 = vmatpush1.msra.mxu0 0.0
        %397 = vmatprep.subr.mxu0 0.0
        %398 = vmatpush1.msra.mxu0 0.0
        %399 = vmatprep.subr.mxu0 0.0
        %400 = vmatpush1.msra.mxu0 0.0
        %401 = vmatprep.subr.mxu0 0.0
        %402 = vmatpush1.msra.mxu0 0.0
        %403 = vmatprep.subr.mxu0 0.0
        %404 = vmatpush1.msra.mxu0 0.0
        %405 = vmatprep.mubr.f32.mxu0 0.0
        %406 = vmatmul.mubr.f32.gmra.mrb[0].mxu0 %v314
        %v407 = vpop.f32.mrb[0].mxu0
        %v408 = vadd.f32 %v310, %v407
        %v409 = vpop.f32.mrb[0].mxu0
        %410 = vmatprep.mubr.f32.mxu0 0.0
        %411 = vmatmul.mubr.f32.gmra.mrb[0].mxu0 %v317
        %v412 = vpop.f32.mrb[0].mxu0
        %v413 = vadd.f32 %v310, %v412
        %v414 = vpop.f32.mrb[0].mxu0
        %415 = vmatprep.mubr.f32.mxu0 0.0
        %416 = vmatmul.mubr.f32.gmra.mrb[0].mxu0 %v320
        %v417 = vpop.f32.mrb[0].mxu0
        %v418 = vadd.f32 %v310, %v417
        %v419 = vpop.f32.mrb[0].mxu0
        %420 = vmatprep.mubr.f32.mxu0 0.0
        %421 = vmatmul.mubr.f32.gmra.mrb[0].mxu0 %v323
        %v422 = vpop.f32.mrb[0].mxu0
        %v423 = vadd.f32 %v310, %v422
        %v424 = vpop.f32.mrb[0].mxu0
        %425 = vmatprep.mubr.f32.mxu0 0.0
        %426 = vmatmul.mubr.f32.gmra.mrb[0].mxu0 %v326
        %v427 = vpop.f32.mrb[0].mxu0
        %v428 = vadd.f32 %v310, %v427
        %v429 = vpop.f32.mrb[0].mxu0
        %430 = vmatprep.mubr.f32.mxu0 0.0
        %431 = vmatmul.mubr.f32.gmra.mrb[0].mxu0 %v329
        %v432 = vpop.f32.mrb[0].mxu0
        %v433 = vadd.f32 %v310, %v432
        %v434 = vpop.f32.mrb[0].mxu0
        %435 = vmatprep.mubr.f32.mxu0 0.0
        %436 = vmatmul.mubr.f32.gmra.mrb[0].mxu0 %v332
        %v437 = vpop.f32.mrb[0].mxu0
        %v438 = vadd.f32 %v310, %v437
        %v439 = vpop.f32.mrb[0].mxu0
        %440 = vmatprep.mubr.f32.mxu0 0.0
        %441 = vmatmul.mubr.f32.gmra.mrb[0].mxu0 %v335
        %v442 = vpop.f32.mrb[0].mxu0
        %v443 = vadd.f32 %v310, %v442
        %v444 = vpop.f32.mrb[0].mxu0
        %445 = vdwg.mxu0
        %446 = vst [vmem:[%s166] sm:$0xff] %v408
        %447 = vst [vmem:[%s166 + $0x8] sm:$0xff] %v413
        %448 = vst [vmem:[%s166 + $0x10] sm:$0xff] %v418
        %449 = vst [vmem:[%s166 + $0x18] sm:$0xff] %v423
        %450 = vst [vmem:[%s166 + $0x20] sm:$0xff] %v428
        %451 = vst [vmem:[%s166 + $0x28] sm:$0xff] %v433
        %452 = vst [vmem:[%s166 + $0x30] sm:$0xff] %v438
        %453 = vst [vmem:[%s166 + $0x38] sm:$0xff] %v443
        %s454 = sand.u32 %s93, 1
        %s455 = scalar_lea.sflag [#allocation3], %s454
        %s456 = sand.u32 %s93, 1
        %s457 = smul.addr %s456, 64
        %s458 = scalar_lea.vmem [#allocation2], %s457
        // Predicated region
        $region33: #{_token_embedding_pallas.1} parent=31 // pred_check
          %p459 = pneg %p103
        $region34: #{_token_embedding_pallas.1} parent=31 // pred_check_branch
          %461 = sbr.rel (%p459) target = $region36
        $region35: #{_token_embedding_pallas.1} parent=31 // pred_region
          %s462 = smul.u32 2, %s17
          %s464 = ssub.s32 1024, 1024
          %465 = vsyncadd %s455, %s464
          %s466 = smul.addr %s462, 4
          %s467 = smul.addr %s466, 128
          %s468 = scalar_lea.hbm %s3, %s467
          %s469 = sshll.u32 %s458, 4
          %s470 = int_to_ptr.vmem [resolvable:$true] %s469
          %475 = dma.vmem_to_hbm [thread:$0]  %s470, 1024, %s468, %s455, 128, 128, 8
        $region36: #{_token_embedding_pallas.1} parent=31 // pred_fallthru
          _
      $region32: #{_token_embedding_pallas.1} parent=5 // pred_fallthru
        _
      %p476 = scmp.le.s32.totalorder 2, %s12
      // Predicated region
      $region37: #{_token_embedding_pallas.1} parent=5 // pred_check
        %p477 = pneg %p476
      $region38: #{_token_embedding_pallas.1} parent=5 // pred_check_branch
        %479 = sbr.rel (%p477) target = $region40
      $region39: #{_token_embedding_pallas.1} parent=5 // pred_region
        %s480 = ssub.s32 %s12, 2
        // Predicated region
        $region41: #{_token_embedding_pallas.1} parent=39 // pred_check
          %p481 = pneg %p109
        $region42: #{_token_embedding_pallas.1} parent=39 // pred_check_branch
          %483 = sbr.rel (%p481) target = $region44
        $region43: #{_token_embedding_pallas.1} parent=39 // pred_region
          %s484 = sand.u32 %s94, 1
          %s485 = scalar_lea.sflag [#allocation3], %s484
          %s486 = sand.u32 %s94, 1
          %s487 = smul.addr %s486, 64
          %s488 = scalar_lea.vmem [#allocation2], %s487
          %489 = dma.done %s485, 1024
        $region44: #{_token_embedding_pallas.1} parent=39 // pred_fallthru
          _
      $region40: #{_token_embedding_pallas.1} parent=5 // pred_fallthru
        _
    $region6: #{_token_embedding_pallas.1} parent=1 // loop_footer
      %s16 = sadd.s32 1, %s12
    $region7: #{_token_embedding_pallas.1} parent=1 // loop_footer_branch
      %11 = sbr.rel target = $region3
    $region8: #{_token_embedding_pallas.1} parent=1 // loop_exit
      _
    %490 = vsyncpa [#allocation3], 1
    %s491 = scalar_lea.sflag [#allocation3], 1
    %492 = vsyncpa %s491, 1

</llo_original>
